<compile_context>
chip_gen: v7x
topology: tpu7x:2x2x1
jax: 0.10.0
libtpu: 0.0.40
codegen_flags: <defaults>
</compile_context>

<pallas_src>
import jax
import jax.numpy as jnp
from jax.experimental import pallas as pl
from jax.experimental.pallas import tpu as pltpu


def _round_up(x, m):
    return ((x + m - 1) // m) * m


def _linear_relu_kernel(x_ref, w_ref, b_ref, o_ref):
    # x_ref: [TM, IN_PAD]   bf16 row tile of node features
    # w_ref: [IN_PAD, TN]   bf16 pre-transposed, lane-dense weight tile
    # b_ref: [1, TN]        f32 bias tile
    # o_ref: [TM, TN]       f32 lane-dense output tile
    acc = jnp.dot(x_ref[...], w_ref[...], preferred_element_type=jnp.float32)
    acc = acc + b_ref[...]                      # bias broadcast over rows (f32)
    o_ref[...] = jnp.maximum(acc, 0.0).astype(o_ref.dtype)


def _vmem_limit_bytes():
    cap = 64 * 1024 * 1024                      # conservative default (v7x per-TC)
    try:
        info = pltpu.get_tpu_info()
        cap = int(getattr(info, "vmem_capacity_bytes", cap))
    except Exception:
        pass
    # Leave headroom for Mosaic-internal scratch: ~55% of physical, <=100 MiB.
    return min(int(cap * 0.55), 100 * 1024 * 1024)


def node_module_layer(features, weight, bias):
    """relu(features @ weight.T + bias) with PyTorch nn.Linear weight layout.

    features: [N, in_feats] f32; weight: [out_feats, in_feats]; bias: [out_feats].
    Returns {"features": [N, out_feats] f32}.
    """
    n, in_feats = features.shape
    out_feats = weight.shape[0]

    vmem_limit = _vmem_limit_bytes()
    budget = int(vmem_limit * 0.85)

    # ---- pad contracting (K) and output (N) dims to lane width (128) -------
    in_pad = _round_up(in_feats, 128)
    out_pad0 = _round_up(out_feats, 128)

    # Resident-weight strategy if the (double-buffer-sized) weight fits in half
    # the budget; otherwise tile output columns so TM never collapses.
    w_full_bytes = 2 * in_pad * out_pad0 * 2            # 2 bufs x bf16
    tn = out_pad0 if w_full_bytes <= budget // 2 else min(512, out_pad0)
    out_pad = _round_up(out_pad0, tn)

    # ---- derive the row tile TM from the remaining VMEM budget -------------
    w_bytes = 2 * in_pad * tn * 2 + 2 * tn * 4          # weight + bias, 2 bufs
    avail = max(budget - w_bytes, 2 * 1024 * 1024)
    per_row = 2 * in_pad * 2 + 2 * tn * 4               # bf16 x + f32 out, 2 bufs each
    tm_budget = max(256, min(2048, (avail // per_row) // 256 * 256))

    n_pad16 = _round_up(max(n, 1), 16)                  # bf16 sublane packing = 16
    if n_pad16 <= tm_budget and n_pad16 < 512:
        tm = n_pad16                                    # small N: single row tile
    elif n_pad16 <= 2 * tm_budget:
        # ~2 row tiles so both v7x TensorCores get work on the parallel axis.
        tm = min(tm_budget, _round_up(-(-n_pad16 // 2), 16))
    else:
        tm = tm_budget
    n_pad = _round_up(n_pad16, tm)

    # ---- one-time wrapper-side layout / dtype work --------------------------
    x = jnp.pad(features.astype(jnp.bfloat16),
                ((0, n_pad - n), (0, in_pad - in_feats)))
    w_t = jnp.pad(weight.T.astype(jnp.bfloat16),
                  ((0, in_pad - in_feats), (0, out_pad - out_feats)))
    b2 = jnp.pad(bias.astype(jnp.float32),
                 (0, out_pad - out_feats)).reshape(1, out_pad)

    grid = (n_pad // tm, out_pad // tn)
    resident = grid[1] == 1                             # weight/bias grid-invariant

    cost = pl.CostEstimate(
        flops=2 * n_pad * in_pad * out_pad,
        transcendentals=0,
        bytes_accessed=2 * (n_pad * in_pad + in_pad * out_pad)
        + 4 * (out_pad + n_pad * out_pad),
    )

    # Make sure the compiler VMEM limit covers what we actually allocate.
    required = (2 * tm * in_pad * 2 + 2 * in_pad * tn * 2 + 2 * tn * 4
                + 2 * tm * tn * 4 + 2 * 1024 * 1024)
    vmem_limit = int(max(vmem_limit, required))

    def build(single_buffer_resident):
        if single_buffer_resident:
            w_spec = pl.BlockSpec((in_pad, tn), lambda i, j: (0, j),
                                  pipeline_mode=pl.Buffered(1))
            b_spec = pl.BlockSpec((1, tn), lambda i, j: (0, j),
                                  pipeline_mode=pl.Buffered(1))
        else:
            w_spec = pl.BlockSpec((in_pad, tn), lambda i, j: (0, j))
            b_spec = pl.BlockSpec((1, tn), lambda i, j: (0, j))
        return pl.pallas_call(
            _linear_relu_kernel,
            out_shape=jax.ShapeDtypeStruct((n_pad, out_pad), jnp.float32),
            grid_spec=pltpu.PrefetchScalarGridSpec(
                num_scalar_prefetch=0,
                grid=grid,
                in_specs=[
                    pl.BlockSpec((tm, in_pad), lambda i, j: (i, 0)),   # row tile
                    w_spec,                                            # weight tile
                    b_spec,                                            # bias tile
                ],
                out_specs=pl.BlockSpec((tm, tn), lambda i, j: (i, j)),
            ),
            compiler_params=pltpu.CompilerParams(
                dimension_semantics=("parallel", "parallel"),
                vmem_limit_bytes=vmem_limit,
            ),
            cost_estimate=cost,
        )

    try:
        # Single-buffer the grid-invariant weight/bias (saves VMEM -> bigger TM).
        out = build(resident)(x, w_t, b2)
    except Exception:
        # Fallback: default double-buffered specs (always supported).
        out = build(False)(x, w_t, b2)

    return {"features": out[:n, :out_feats]}


if __name__ == "__main__":
    key = jax.random.PRNGKey(0)
    k_x, k_w, k_b = jax.random.split(key, 3)

    N_NODES, IN_FEATS, OUT_FEATS = 8, 32, 64

    # Deterministic synthetic parameters (PyTorch nn.Linear shapes / init bound).
    features = jax.random.normal(k_x, (N_NODES, IN_FEATS), dtype=jnp.float32)
    bound = 1.0 / (IN_FEATS ** 0.5)
    weight = jax.random.uniform(k_w, (OUT_FEATS, IN_FEATS),
                                minval=-bound, maxval=bound, dtype=jnp.float32)
    bias = jax.random.uniform(k_b, (OUT_FEATS,),
                              minval=-bound, maxval=bound, dtype=jnp.float32)

    result = node_module_layer(features, weight, bias)
    h = jax.block_until_ready(result["features"])

    # Reference check (plain f32 JAX). Kernel feeds the MXU bf16 operands with
    # f32 accumulation, so tolerance is relaxed accordingly.
    ref = jnp.maximum(features @ weight.T + bias, 0.0)
    assert h.shape == (N_NODES, OUT_FEATS)
    assert jnp.allclose(h, ref, atol=3e-2, rtol=3e-2), float(jnp.abs(h - ref).max())

    print("KERNEL_OK")
</pallas_src>

<mosaic_0001>
module attributes {stable_mosaic.version = 11 : i64} {
  func.func @_linear_relu_kernel(%arg0: i32, %arg1: i32, %arg2: memref<16x128xbf16, #tpu.memory_space<vmem>>, %arg3: memref<128x128xbf16, #tpu.memory_space<vmem>>, %arg4: memref<1x128xf32, #tpu.memory_space<vmem>>, %arg5: memref<16x128xf32, #tpu.memory_space<vmem>>) attributes {dimension_semantics = [#tpu.dimension_semantics<parallel>, #tpu.dimension_semantics<parallel>], iteration_bounds = array<i64: 1, 1>, scalar_prefetch = 0 : i64, scratch_operands = 0 : i64, tpu.core_type = #tpu.core_type<tc>, window_params = [{transform_indices = @transform_0, window_bounds = array<i64: 16, 128>}, {pipeline_mode = #tpu.pipeline_mode<synchronous>, transform_indices = @transform_1, window_bounds = array<i64: 128, 128>}, {pipeline_mode = #tpu.pipeline_mode<synchronous>, transform_indices = @transform_2, window_bounds = array<i64: 1, 128>}, {transform_indices = @transform_3, window_bounds = array<i64: 16, 128>}]} {
    %c0 = arith.constant 0 : index
    %c0_0 = arith.constant 0 : index
    %0 = vector.load %arg2[%c0, %c0_0] : memref<16x128xbf16, #tpu.memory_space<vmem>>, vector<16x128xbf16>
    %c0_1 = arith.constant 0 : index
    %c0_2 = arith.constant 0 : index
    %1 = vector.load %arg3[%c0_1, %c0_2] : memref<128x128xbf16, #tpu.memory_space<vmem>>, vector<128x128xbf16>
    %cst = arith.constant dense<0.000000e+00> : vector<16x128xf32>
    %2 = tpu.matmul %0, %1, %cst {dimension_numbers = #tpu.dot_dimension_numbers<[1], [0], [0], [1], [0, 0, 1, 1], [], []>} : vector<16x128xbf16>, vector<128x128xbf16>, vector<16x128xf32> -> vector<16x128xf32>
    %c0_3 = arith.constant 0 : index
    %c0_4 = arith.constant 0 : index
    %3 = vector.load %arg4[%c0_3, %c0_4] : memref<1x128xf32, #tpu.memory_space<vmem>>, vector<1x128xf32>
    %4 = vector.broadcast %3 : vector<1x128xf32> to vector<16x128xf32>
    %5 = arith.addf %2, %4 : vector<16x128xf32>
    %cst_5 = arith.constant 0.000000e+00 : f32
    %6 = vector.broadcast %cst_5 : f32 to vector<16x128xf32>
    %7 = arith.maximumf %5, %6 : vector<16x128xf32>
    %c0_6 = arith.constant 0 : index
    %c0_7 = arith.constant 0 : index
    %8 = vector.load %arg5[%c0_6, %c0_7] : memref<16x128xf32, #tpu.memory_space<vmem>>, vector<16x128xf32>
    tpu.vector_store %arg5[%c0_6, %c0_7], %7 {strides = array<i32>} : memref<16x128xf32, #tpu.memory_space<vmem>>, vector<16x128xf32>,
    return
  }
  func.func @transform_0(%arg0: i32, %arg1: i32) -> (i32, i32) {
    %c0_i32 = arith.constant 0 : i32
    %c0_i32_0 = arith.constant 0 : i32
    return %arg0, %c0_i32 : i32, i32
  }
  func.func @transform_1(%arg0: i32, %arg1: i32) -> (i32, i32) {
    %c0_i32 = arith.constant 0 : i32
    %c0_i32_0 = arith.constant 0 : i32
    return %c0_i32, %arg1 : i32, i32
  }
  func.func @transform_2(%arg0: i32, %arg1: i32) -> (i32, i32) {
    %c0_i32 = arith.constant 0 : i32
    %c0_i32_0 = arith.constant 0 : i32
    return %c0_i32, %arg1 : i32, i32
  }
  func.func @transform_3(%arg0: i32, %arg1: i32) -> (i32, i32) {
    %c0_i32 = arith.constant 0 : i32
    return %arg0, %arg1 : i32, i32
  }
}

module attributes {stable_mosaic.version = 11 : i64} {
  func.func @_linear_relu_kernel(%arg0: i32, %arg1: i32, %arg2: memref<16x128xbf16, #tpu.memory_space<vmem>>, %arg3: memref<128x128xbf16, #tpu.memory_space<vmem>>, %arg4: memref<1x128xf32, #tpu.memory_space<vmem>>, %arg5: memref<16x128xf32, #tpu.memory_space<vmem>>) attributes {dimension_semantics = [#tpu.dimension_semantics<parallel>, #tpu.dimension_semantics<parallel>], iteration_bounds = array<i64: 1, 1>, scalar_prefetch = 0 : i64, scratch_operands = 0 : i64, tpu.core_type = #tpu.core_type<tc>, window_params = [{transform_indices = @transform_0, window_bounds = array<i64: 16, 128>}, {transform_indices = @transform_1, window_bounds = array<i64: 128, 128>}, {transform_indices = @transform_2, window_bounds = array<i64: 1, 128>}, {transform_indices = @transform_3, window_bounds = array<i64: 16, 128>}]} {
    %c0 = arith.constant 0 : index
    %c0_0 = arith.constant 0 : index
    %0 = vector.load %arg2[%c0, %c0_0] : memref<16x128xbf16, #tpu.memory_space<vmem>>, vector<16x128xbf16>
    %c0_1 = arith.constant 0 : index
    %c0_2 = arith.constant 0 : index
    %1 = vector.load %arg3[%c0_1, %c0_2] : memref<128x128xbf16, #tpu.memory_space<vmem>>, vector<128x128xbf16>
    %cst = arith.constant dense<0.000000e+00> : vector<16x128xf32>
    %2 = tpu.matmul %0, %1, %cst {dimension_numbers = #tpu.dot_dimension_numbers<[1], [0], [0], [1], [0, 0, 1, 1], [], []>} : vector<16x128xbf16>, vector<128x128xbf16>, vector<16x128xf32> -> vector<16x128xf32>
    %c0_3 = arith.constant 0 : index
    %c0_4 = arith.constant 0 : index
    %3 = vector.load %arg4[%c0_3, %c0_4] : memref<1x128xf32, #tpu.memory_space<vmem>>, vector<1x128xf32>
    %4 = vector.broadcast %3 : vector<1x128xf32> to vector<16x128xf32>
    %5 = arith.addf %2, %4 : vector<16x128xf32>
    %cst_5 = arith.constant 0.000000e+00 : f32
    %6 = vector.broadcast %cst_5 : f32 to vector<16x128xf32>
    %7 = arith.maximumf %5, %6 : vector<16x128xf32>
    %c0_6 = arith.constant 0 : index
    %c0_7 = arith.constant 0 : index
    %8 = vector.load %arg5[%c0_6, %c0_7] : memref<16x128xf32, #tpu.memory_space<vmem>>, vector<16x128xf32>
    tpu.vector_store %arg5[%c0_6, %c0_7], %7 {strides = array<i32>} : memref<16x128xf32, #tpu.memory_space<vmem>>, vector<16x128xf32>,
    return
  }
  func.func @transform_0(%arg0: i32, %arg1: i32) -> (i32, i32) {
    %c0_i32 = arith.constant 0 : i32
    %c0_i32_0 = arith.constant 0 : i32
    return %arg0, %c0_i32 : i32, i32
  }
  func.func @transform_1(%arg0: i32, %arg1: i32) -> (i32, i32) {
    %c0_i32 = arith.constant 0 : i32
    %c0_i32_0 = arith.constant 0 : i32
    return %c0_i32, %arg1 : i32, i32
  }
  func.func @transform_2(%arg0: i32, %arg1: i32) -> (i32, i32) {
    %c0_i32 = arith.constant 0 : i32
    %c0_i32_0 = arith.constant 0 : i32
    return %c0_i32, %arg1 : i32, i32
  }
  func.func @transform_3(%arg0: i32, %arg1: i32) -> (i32, i32) {
    %c0_i32 = arith.constant 0 : i32
    return %arg0, %arg1 : i32, i32
  }
}

</mosaic_0001>

<llo_original>
// kernel: tpu_custom_call.1
$region0: #{tpu_custom_call.1}
  #allocation0 [shape = 'u32[]', space=smem, size = 0x4, offset = 0x4, fixed_abs, tag = 'smem constant byte address 0x4 - core index']
  #allocation1 [shape = 'u32[144,128]{1,0:T(1,128)}', space=vmem, size = 0x12000, scoped, tag = 'internal scratch']
  %s0 = inlined_call_operand.hbm [shape: bf16[16,128], index: 0, kind: input, shape index: {}]
  %s1 = inlined_call_operand.hbm [shape: bf16[128,128], index: 1, kind: input, shape index: {}]
  %s2 = inlined_call_operand.vmem [shape: f32[1,128], index: 2, kind: input, shape index: {}]
  %s3 = inlined_call_operand.hbm [shape: f32[16,128], index: 3, kind: output, shape index: {}]
  %s4 = sld [smem:[#allocation0]]
  $region30: #{tpu_custom_call.1} parent=0
    _
  %s6 = ssub.s32 1, %s4
  %s7 = scalar_select 0, %s6, %s4
  $region1: #{tpu_custom_call.1} parent=0
    #allocation2 [shape = 'u8[4096]{0}', space=vmem, size = 0x1000, scoped, tag = 'input window, operand 0, single buffered']
    #allocation3 [shape = 's32[1]{0}', space=sflag, size = 0x4, scoped, tag = 'scoped memory for tpu_custom_call.1']
    #allocation4 [shape = 's32[1]{0}', space=sflag, size = 0x4, scoped, tag = 'scoped memory for tpu_custom_call.1']
    #allocation5 [shape = 'u8[32768]{0}', space=vmem, size = 0x8000, scoped, tag = 'input window, operand 1, single buffered']
    #allocation6 [shape = 's32[1]{0}', space=sflag, size = 0x4, scoped, tag = 'scoped memory for tpu_custom_call.1']
    #allocation7 [shape = 'u8[8192]{0}', space=vmem, size = 0x2000, scoped, tag = 'output window, operand 0, single buffered']
    %8 = vsyncpa [#allocation3], 0
    %9 = vsyncpa [#allocation6], 0
    %10 = vsyncpa [#allocation4], 0
    // Predicated region
    $region2: #{tpu_custom_call.1} parent=1 // pred_check
      _
    $region3: #{tpu_custom_call.1} parent=1 // pred_check_branch
      %12 = sbr.rel (0) target = $region5
    $region4: #{tpu_custom_call.1} parent=1 // pred_region
      %s14 = ssub.s32 128, 128
      %15 = vsyncadd [#allocation3], %s14
      %s16 = sshll.u32 [#allocation2], 4
      %s17 = int_to_ptr.vmem [resolvable:$true] %s16
      %22 = dma.hbm_to_vmem [thread:$0]  %s0, 128, %s17, [#allocation3], 64, 64, 4
    $region5: #{tpu_custom_call.1} parent=1 // pred_fallthru
      _
    // Predicated region
    $region6: #{tpu_custom_call.1} parent=1 // pred_check
      _
    $region7: #{tpu_custom_call.1} parent=1 // pred_check_branch
      %24 = sbr.rel (0) target = $region9
    $region8: #{tpu_custom_call.1} parent=1 // pred_region
      %s26 = ssub.s32 1024, 1024
      %27 = vsyncadd [#allocation6], %s26
      %s28 = sshll.u32 [#allocation5], 4
      %s29 = int_to_ptr.vmem [resolvable:$true] %s28
      %34 = dma.hbm_to_vmem [thread:$0]  %s1, 1024, %s29, [#allocation6], 64, 64, 4
    $region9: #{tpu_custom_call.1} parent=1 // pred_fallthru
      _
    // Predicated region
    $region10: #{tpu_custom_call.1} parent=1 // pred_check
      _
    $region11: #{tpu_custom_call.1} parent=1 // pred_check_branch
      %36 = sbr.rel (0) target = $region13
    $region12: #{tpu_custom_call.1} parent=1 // pred_region
      _
    $region13: #{tpu_custom_call.1} parent=1 // pred_fallthru
      _
    // Predicated region
    $region14: #{tpu_custom_call.1} parent=1 // pred_check
      _
    $region15: #{tpu_custom_call.1} parent=1 // pred_check_branch
      %38 = sbr.rel (0) target = $region17
    $region16: #{tpu_custom_call.1} parent=1 // pred_region
      %39 = dma.done [#allocation3], 128
    $region17: #{tpu_custom_call.1} parent=1 // pred_fallthru
      _
    // Predicated region
    $region18: #{tpu_custom_call.1} parent=1 // pred_check
      _
    $region19: #{tpu_custom_call.1} parent=1 // pred_check_branch
      %41 = sbr.rel (0) target = $region21
    $region20: #{tpu_custom_call.1} parent=1 // pred_region
      %42 = dma.done [#allocation6], 1024
    $region21: #{tpu_custom_call.1} parent=1 // pred_fallthru
      _
    %v44 = vld [vmem:[#allocation2] sm:$0xf]
    %v45 = vld [vmem:[#allocation2 + $0x4] sm:$0xf]
    %v46 = vld [vmem:[#allocation5] sm:$0xf]
    %v47 = vld [vmem:[#allocation5 + $0x4] sm:$0xf]
    %v48 = vld [vmem:[#allocation5 + $0x8] sm:$0xf]
    %v49 = vld [vmem:[#allocation5 + $0xc] sm:$0xf]
    %v50 = vld [vmem:[#allocation5 + $0x10] sm:$0xf]
    %v51 = vld [vmem:[#allocation5 + $0x14] sm:$0xf]
    %v52 = vld [vmem:[#allocation5 + $0x18] sm:$0xf]
    %v53 = vld [vmem:[#allocation5 + $0x1c] sm:$0xf]
    %v54 = vld [vmem:[#allocation5 + $0x20] sm:$0xf]
    %v55 = vld [vmem:[#allocation5 + $0x24] sm:$0xf]
    %v56 = vld [vmem:[#allocation5 + $0x28] sm:$0xf]
    %v57 = vld [vmem:[#allocation5 + $0x2c] sm:$0xf]
    %v58 = vld [vmem:[#allocation5 + $0x30] sm:$0xf]
    %v59 = vld [vmem:[#allocation5 + $0x34] sm:$0xf]
    %v60 = vld [vmem:[#allocation5 + $0x38] sm:$0xf]
    %v61 = vld [vmem:[#allocation5 + $0x3c] sm:$0xf]
    %v62 = vld [vmem:[%s2] sm:$0x1]
    %v64 = vlaneseq
    %v65 = vshrl.u32 %v64, 7
    %v66 = vsub.s32 0, %v65
    %v67 = vrot.slane %v62, %v66
    %v71 = vunpack.c.l.b16 %v44
    %v72 = vunpack.c.l.b16 %v45
    %v73 = vpack.c.b16 %v72, %v71
    %v91 = vunpack.c.l.b16 %v46
    %v92 = vunpack.c.l.b16 %v47
    %v93 = vunpack.c.l.b16 %v48
    %v94 = vunpack.c.l.b16 %v49
    %v95 = vunpack.c.l.b16 %v50
    %v96 = vunpack.c.l.b16 %v51
    %v97 = vunpack.c.l.b16 %v52
    %v98 = vunpack.c.l.b16 %v53
    %v99 = vunpack.c.l.b16 %v54
    %v100 = vunpack.c.l.b16 %v55
    %v101 = vunpack.c.l.b16 %v56
    %v102 = vunpack.c.l.b16 %v57
    %v103 = vunpack.c.l.b16 %v58
    %v104 = vunpack.c.l.b16 %v59
    %v105 = vunpack.c.l.b16 %v60
    %v106 = vunpack.c.l.b16 %v61
    %v107 = vpack.c.b16 %v92, %v91
    %v108 = vpack.c.b16 %v94, %v93
    %v109 = vpack.c.b16 %v96, %v95
    %v110 = vpack.c.b16 %v98, %v97
    %v111 = vpack.c.b16 %v100, %v99
    %v112 = vpack.c.b16 %v102, %v101
    %v113 = vpack.c.b16 %v104, %v103
    %v114 = vpack.c.b16 %v106, %v105
    %123 = vmatprep.subr.bf16.mxu0 0
    %124 = vmatpush1.bf16.msra.mxu0 %v107
    %125 = vmatprep.subr.bf16.mxu0 0
    %126 = vmatpush1.bf16.msra.mxu0 %v108
    %127 = vmatprep.subr.bf16.mxu0 0
    %128 = vmatpush1.bf16.msra.mxu0 %v109
    %129 = vmatprep.subr.bf16.mxu0 0
    %130 = vmatpush1.bf16.msra.mxu0 %v110
    %131 = vmatprep.subr.bf16.mxu0 0
    %132 = vmatpush1.bf16.msra.mxu0 %v111
    %133 = vmatprep.subr.bf16.mxu0 0
    %134 = vmatpush1.bf16.msra.mxu0 %v112
    %135 = vmatprep.subr.bf16.mxu0 0
    %136 = vmatpush1.bf16.msra.mxu0 %v113
    %137 = vmatprep.subr.bf16.mxu0 0
    %138 = vmatpush1.bf16.msra.mxu0 %v114
    %139 = vmatprep.subr.bf16.mxu0 0
    %140 = vmatpush1.bf16.msra.mxu0 0
    %141 = vmatprep.subr.bf16.mxu0 0
    %142 = vmatpush1.bf16.msra.mxu0 0
    %143 = vmatprep.subr.bf16.mxu0 0
    %144 = vmatpush1.bf16.msra.mxu0 0
    %145 = vmatprep.subr.bf16.mxu0 0
    %146 = vmatpush1.bf16.msra.mxu0 0
    %147 = vmatprep.subr.bf16.mxu0 0
    %148 = vmatpush1.bf16.msra.mxu0 0
    %149 = vmatprep.subr.bf16.mxu0 0
    %150 = vmatpush1.bf16.msra.mxu0 0
    %151 = vmatprep.subr.bf16.mxu0 0
    %152 = vmatpush1.bf16.msra.mxu0 0
    %153 = vmatprep.subr.bf16.mxu0 0
    %154 = vmatpush1.bf16.msra.mxu0 0
    %155 = vmatprep.mubr.bf16.mxu0 0
    %156 = vmatmul.mubr.bf16.gmra.mrb[0].mxu0 %v73
    %v157 = vpop.f32.mrb[0].mxu0
    %v158 = vadd.f32 %v67, %v157
    %v159 = vpop.f32.mrb[0].mxu0
    %v160 = vpop.f32.mrb[0].mxu0
    %v161 = vadd.f32 %v67, %v160
    %v162 = vpop.f32.mrb[0].mxu0
    %163 = vdwg.mxu0
    %v164 = vmax.f32 %v158, 0.0
    %v165 = vmax.f32 %v161, 0.0
    %166 = vst [vmem:[#allocation7] sm:$0xff] %v164
    %167 = vst [vmem:[#allocation7 + $0x8] sm:$0xff] %v165
    // Predicated region
    $region22: #{tpu_custom_call.1} parent=1 // pred_check
      _
    $region23: #{tpu_custom_call.1} parent=1 // pred_check_branch
      %169 = sbr.rel (0) target = $region25
    $region24: #{tpu_custom_call.1} parent=1 // pred_region
      %s171 = ssub.s32 256, 256
      %172 = vsyncadd [#allocation4], %s171
      %s173 = sshll.u32 [#allocation7], 4
      %s174 = int_to_ptr.vmem [resolvable:$true] %s173
      %179 = dma.vmem_to_hbm [thread:$0]  %s174, 256, %s3, [#allocation4], 128, 128, 8
    $region25: #{tpu_custom_call.1} parent=1 // pred_fallthru
      _
    // Predicated region
    $region26: #{tpu_custom_call.1} parent=1 // pred_check
      _
    $region27: #{tpu_custom_call.1} parent=1 // pred_check_branch
      %181 = sbr.rel (0) target = $region29
    $region28: #{tpu_custom_call.1} parent=1 // pred_region
      %182 = dma.done [#allocation4], 256
    $region29: #{tpu_custom_call.1} parent=1 // pred_fallthru
      _
    %183 = vsyncpa [#allocation3], 1
    %184 = vsyncpa [#allocation6], 1
    %185 = vsyncpa [#allocation4], 1

// kernel: tpu_custom_call.1
$region0: #{tpu_custom_call.1}
  #allocation0 [shape = 'u32[]', space=smem, size = 0x4, offset = 0x4, fixed_abs, tag = 'smem constant byte address 0x4 - core index']
  #allocation1 [shape = 'u32[144,128]{1,0:T(1,128)}', space=vmem, size = 0x12000, scoped, tag = 'internal scratch']
  %s0 = inlined_call_operand.hbm [shape: bf16[16,128], index: 0, kind: input, shape index: {}]
  %s1 = inlined_call_operand.hbm [shape: bf16[128,128], index: 1, kind: input, shape index: {}]
  %s2 = inlined_call_operand.vmem [shape: f32[1,128], index: 2, kind: input, shape index: {}]
  %s3 = inlined_call_operand.hbm [shape: f32[16,128], index: 3, kind: output, shape index: {}]
  %s4 = sld [smem:[#allocation0]]
  $region30: #{tpu_custom_call.1} parent=0
    _
  %s6 = ssub.s32 1, %s4
  %s7 = scalar_select 0, %s6, %s4
  $region1: #{tpu_custom_call.1} parent=0
    #allocation2 [shape = 'u8[4096]{0}', space=vmem, size = 0x1000, scoped, tag = 'input window, operand 0, single buffered']
    #allocation3 [shape = 's32[1]{0}', space=sflag, size = 0x4, scoped, tag = 'scoped memory for tpu_custom_call.1']
    #allocation4 [shape = 's32[1]{0}', space=sflag, size = 0x4, scoped, tag = 'scoped memory for tpu_custom_call.1']
    #allocation5 [shape = 'u8[32768]{0}', space=vmem, size = 0x8000, scoped, tag = 'input window, operand 1, single buffered']
    #allocation6 [shape = 's32[1]{0}', space=sflag, size = 0x4, scoped, tag = 'scoped memory for tpu_custom_call.1']
    #allocation7 [shape = 'u8[8192]{0}', space=vmem, size = 0x2000, scoped, tag = 'output window, operand 0, single buffered']
    %8 = vsyncpa [#allocation3], 0
    %9 = vsyncpa [#allocation6], 0
    %10 = vsyncpa [#allocation4], 0
    // Predicated region
    $region2: #{tpu_custom_call.1} parent=1 // pred_check
      _
    $region3: #{tpu_custom_call.1} parent=1 // pred_check_branch
      %12 = sbr.rel (0) target = $region5
    $region4: #{tpu_custom_call.1} parent=1 // pred_region
      %s14 = ssub.s32 128, 128
      %15 = vsyncadd [#allocation3], %s14
      %s16 = sshll.u32 [#allocation2], 4
      %s17 = int_to_ptr.vmem [resolvable:$true] %s16
      %22 = dma.hbm_to_vmem [thread:$0]  %s0, 128, %s17, [#allocation3], 64, 64, 4
    $region5: #{tpu_custom_call.1} parent=1 // pred_fallthru
      _
    // Predicated region
    $region6: #{tpu_custom_call.1} parent=1 // pred_check
      _
    $region7: #{tpu_custom_call.1} parent=1 // pred_check_branch
      %24 = sbr.rel (0) target = $region9
    $region8: #{tpu_custom_call.1} parent=1 // pred_region
      %s26 = ssub.s32 1024, 1024
      %27 = vsyncadd [#allocation6], %s26
      %s28 = sshll.u32 [#allocation5], 4
      %s29 = int_to_ptr.vmem [resolvable:$true] %s28
      %34 = dma.hbm_to_vmem [thread:$0]  %s1, 1024, %s29, [#allocation6], 64, 64, 4
    $region9: #{tpu_custom_call.1} parent=1 // pred_fallthru
      _
    // Predicated region
    $region10: #{tpu_custom_call.1} parent=1 // pred_check
      _
    $region11: #{tpu_custom_call.1} parent=1 // pred_check_branch
      %36 = sbr.rel (0) target = $region13
    $region12: #{tpu_custom_call.1} parent=1 // pred_region
      _
    $region13: #{tpu_custom_call.1} parent=1 // pred_fallthru
      _
    // Predicated region
    $region14: #{tpu_custom_call.1} parent=1 // pred_check
      _
    $region15: #{tpu_custom_call.1} parent=1 // pred_check_branch
      %38 = sbr.rel (0) target = $region17
    $region16: #{tpu_custom_call.1} parent=1 // pred_region
      %39 = dma.done [#allocation3], 128
    $region17: #{tpu_custom_call.1} parent=1 // pred_fallthru
      _
    // Predicated region
    $region18: #{tpu_custom_call.1} parent=1 // pred_check
      _
    $region19: #{tpu_custom_call.1} parent=1 // pred_check_branch
      %41 = sbr.rel (0) target = $region21
    $region20: #{tpu_custom_call.1} parent=1 // pred_region
      %42 = dma.done [#allocation6], 1024
    $region21: #{tpu_custom_call.1} parent=1 // pred_fallthru
      _
    %v44 = vld [vmem:[#allocation2] sm:$0xf]
    %v45 = vld [vmem:[#allocation2 + $0x4] sm:$0xf]
    %v46 = vld [vmem:[#allocation5] sm:$0xf]
    %v47 = vld [vmem:[#allocation5 + $0x4] sm:$0xf]
    %v48 = vld [vmem:[#allocation5 + $0x8] sm:$0xf]
    %v49 = vld [vmem:[#allocation5 + $0xc] sm:$0xf]
    %v50 = vld [vmem:[#allocation5 + $0x10] sm:$0xf]
    %v51 = vld [vmem:[#allocation5 + $0x14] sm:$0xf]
    %v52 = vld [vmem:[#allocation5 + $0x18] sm:$0xf]
    %v53 = vld [vmem:[#allocation5 + $0x1c] sm:$0xf]
    %v54 = vld [vmem:[#allocation5 + $0x20] sm:$0xf]
    %v55 = vld [vmem:[#allocation5 + $0x24] sm:$0xf]
    %v56 = vld [vmem:[#allocation5 + $0x28] sm:$0xf]
    %v57 = vld [vmem:[#allocation5 + $0x2c] sm:$0xf]
    %v58 = vld [vmem:[#allocation5 + $0x30] sm:$0xf]
    %v59 = vld [vmem:[#allocation5 + $0x34] sm:$0xf]
    %v60 = vld [vmem:[#allocation5 + $0x38] sm:$0xf]
    %v61 = vld [vmem:[#allocation5 + $0x3c] sm:$0xf]
    %v62 = vld [vmem:[%s2] sm:$0x1]
    %v64 = vlaneseq
    %v65 = vshrl.u32 %v64, 7
    %v66 = vsub.s32 0, %v65
    %v67 = vrot.slane %v62, %v66
    %v71 = vunpack.c.l.b16 %v44
    %v72 = vunpack.c.l.b16 %v45
    %v73 = vpack.c.b16 %v72, %v71
    %v91 = vunpack.c.l.b16 %v46
    %v92 = vunpack.c.l.b16 %v47
    %v93 = vunpack.c.l.b16 %v48
    %v94 = vunpack.c.l.b16 %v49
    %v95 = vunpack.c.l.b16 %v50
    %v96 = vunpack.c.l.b16 %v51
    %v97 = vunpack.c.l.b16 %v52
    %v98 = vunpack.c.l.b16 %v53
    %v99 = vunpack.c.l.b16 %v54
    %v100 = vunpack.c.l.b16 %v55
    %v101 = vunpack.c.l.b16 %v56
    %v102 = vunpack.c.l.b16 %v57
    %v103 = vunpack.c.l.b16 %v58
    %v104 = vunpack.c.l.b16 %v59
    %v105 = vunpack.c.l.b16 %v60
    %v106 = vunpack.c.l.b16 %v61
    %v107 = vpack.c.b16 %v92, %v91
    %v108 = vpack.c.b16 %v94, %v93
    %v109 = vpack.c.b16 %v96, %v95
    %v110 = vpack.c.b16 %v98, %v97
    %v111 = vpack.c.b16 %v100, %v99
    %v112 = vpack.c.b16 %v102, %v101
    %v113 = vpack.c.b16 %v104, %v103
    %v114 = vpack.c.b16 %v106, %v105
    %123 = vmatprep.subr.bf16.mxu0 0
    %124 = vmatpush1.bf16.msra.mxu0 %v107
    %125 = vmatprep.subr.bf16.mxu0 0
    %126 = vmatpush1.bf16.msra.mxu0 %v108
    %127 = vmatprep.subr.bf16.mxu0 0
    %128 = vmatpush1.bf16.msra.mxu0 %v109
    %129 = vmatprep.subr.bf16.mxu0 0
    %130 = vmatpush1.bf16.msra.mxu0 %v110
    %131 = vmatprep.subr.bf16.mxu0 0
    %132 = vmatpush1.bf16.msra.mxu0 %v111
    %133 = vmatprep.subr.bf16.mxu0 0
    %134 = vmatpush1.bf16.msra.mxu0 %v112
    %135 = vmatprep.subr.bf16.mxu0 0
    %136 = vmatpush1.bf16.msra.mxu0 %v113
    %137 = vmatprep.subr.bf16.mxu0 0
    %138 = vmatpush1.bf16.msra.mxu0 %v114
    %139 = vmatprep.subr.bf16.mxu0 0
    %140 = vmatpush1.bf16.msra.mxu0 0
    %141 = vmatprep.subr.bf16.mxu0 0
    %142 = vmatpush1.bf16.msra.mxu0 0
    %143 = vmatprep.subr.bf16.mxu0 0
    %144 = vmatpush1.bf16.msra.mxu0 0
    %145 = vmatprep.subr.bf16.mxu0 0
    %146 = vmatpush1.bf16.msra.mxu0 0
    %147 = vmatprep.subr.bf16.mxu0 0
    %148 = vmatpush1.bf16.msra.mxu0 0
    %149 = vmatprep.subr.bf16.mxu0 0
    %150 = vmatpush1.bf16.msra.mxu0 0
    %151 = vmatprep.subr.bf16.mxu0 0
    %152 = vmatpush1.bf16.msra.mxu0 0
    %153 = vmatprep.subr.bf16.mxu0 0
    %154 = vmatpush1.bf16.msra.mxu0 0
    %155 = vmatprep.mubr.bf16.mxu0 0
    %156 = vmatmul.mubr.bf16.gmra.mrb[0].mxu0 %v73
    %v157 = vpop.f32.mrb[0].mxu0
    %v158 = vadd.f32 %v67, %v157
    %v159 = vpop.f32.mrb[0].mxu0
    %v160 = vpop.f32.mrb[0].mxu0
    %v161 = vadd.f32 %v67, %v160
    %v162 = vpop.f32.mrb[0].mxu0
    %163 = vdwg.mxu0
    %v164 = vmax.f32 %v158, 0.0
    %v165 = vmax.f32 %v161, 0.0
    %166 = vst [vmem:[#allocation7] sm:$0xff] %v164
    %167 = vst [vmem:[#allocation7 + $0x8] sm:$0xff] %v165
    // Predicated region
    $region22: #{tpu_custom_call.1} parent=1 // pred_check
      _
    $region23: #{tpu_custom_call.1} parent=1 // pred_check_branch
      %169 = sbr.rel (0) target = $region25
    $region24: #{tpu_custom_call.1} parent=1 // pred_region
      %s171 = ssub.s32 256, 256
      %172 = vsyncadd [#allocation4], %s171
      %s173 = sshll.u32 [#allocation7], 4
      %s174 = int_to_ptr.vmem [resolvable:$true] %s173
      %179 = dma.vmem_to_hbm [thread:$0]  %s174, 256, %s3, [#allocation4], 128, 128, 8
    $region25: #{tpu_custom_call.1} parent=1 // pred_fallthru
      _
    // Predicated region
    $region26: #{tpu_custom_call.1} parent=1 // pred_check
      _
    $region27: #{tpu_custom_call.1} parent=1 // pred_check_branch
      %181 = sbr.rel (0) target = $region29
    $region28: #{tpu_custom_call.1} parent=1 // pred_region
      %182 = dma.done [#allocation4], 256
    $region29: #{tpu_custom_call.1} parent=1 // pred_fallthru
      _
    %183 = vsyncpa [#allocation3], 1
    %184 = vsyncpa [#allocation6], 1
    %185 = vsyncpa [#allocation4], 1

</llo_original>
